<compile_context>
chip_gen: v5e
topology: v5e:2x2
jax: 0.10.0
libtpu: 0.0.40
codegen_flags: <defaults>
</compile_context>

<pallas_src>
import math
from functools import partial

import jax
import jax.numpy as jnp
from jax import lax
from jax.experimental import pallas as pl
from jax.experimental.pallas import tpu as pltpu

_INV_SQRT2 = 0.7071067811865476
_SQRT_2_OVER_PI = 0.7978845608028654


def _mlp_kernel(x_ref, w1_ref, b1_ref, w2_ref, b2_ref, o_ref, acc_ref, *,
                approx_gelu):
    """One (row_tile, hidden_tile) grid step of GELU(x@W1+b1)@W2 + b2."""
    j = pl.program_id(1)  # hidden-chunk index (reduction axis for fc2)

    @pl.when(j == 0)
    def _init():
        # Fold b2 directly into the accumulator init.
        acc_ref[...] = jnp.broadcast_to(
            b2_ref[...].astype(jnp.float32), acc_ref.shape)

    # fc1 over this hidden chunk: (tm, Cin) @ (Cin, th) + (1, th)
    h = jnp.dot(x_ref[...], w1_ref[...], preferred_element_type=jnp.float32)
    h = h + b1_ref[...].astype(jnp.float32)
    if approx_gelu:
        # tanh approximation (EUP-friendly); numerics differ slightly from torch's default
        h = 0.5 * h * (1.0 + jnp.tanh(_SQRT_2_OVER_PI * (h + 0.044715 * h * h * h)))
    else:
        # exact (erf-based) GELU to match torch.nn.GELU()'s default
        h = 0.5 * h * (1.0 + lax.erf(h * _INV_SQRT2))

    # fc2 partial sum over the hidden chunk: (tm, th) @ (th, Cout)
    acc_ref[...] += jnp.dot(h.astype(w2_ref.dtype), w2_ref[...],
                            preferred_element_type=jnp.float32)

    @pl.when(j == pl.num_programs(1) - 1)
    def _finalize():
        o_ref[...] = acc_ref[...].astype(o_ref.dtype)


def _round_up(v, m):
    return (v + m - 1) // m * m


def _tpu_budget():
    """Per-TensorCore usable VMEM budget, row-tile target, megacore hint."""
    phys = 64 * 1024 * 1024      # conservative default for unknown chips
    row_target = 512
    two_tc = False
    try:
        kind = jax.devices()[0].device_kind.lower()
    except Exception:
        kind = ""
    if "v5" in kind:
        phys, row_target = 128 * 1024 * 1024, 512
    elif "v6" in kind:
        phys, row_target = 128 * 1024 * 1024, 1024
    elif "v7" in kind or "7x" in kind:
        phys, row_target, two_tc = 64 * 1024 * 1024, 512, True
    # leave headroom for compiler-internal scratch / double buffers
    budget = min(phys - 16 * 1024 * 1024, int(phys * 0.80))
    return budget, row_target, two_tc, phys


def _vmem_need(rt, ht, c_in, c_out_pad, x_bytes, w_bytes):
    """Estimated VMEM footprint of one grid step (double-buffered tiles)."""
    fp32 = 4
    need = 2 * (rt * c_in * x_bytes            # x tile
                + c_in * ht * w_bytes          # w1 tile
                + ht * w_bytes                 # b1 tile
                + ht * c_out_pad * w_bytes     # w2 tile
                + c_out_pad * w_bytes          # b2 tile
                + rt * c_out_pad * x_bytes)    # out tile
    need += rt * c_out_pad * fp32              # f32 accumulator scratch
    need += 2 * rt * ht * fp32                 # materialized GELU intermediate + cast copy
    return need


def _row_candidates(n, sublane, target):
    top = min(_round_up(target, sublane), _round_up(max(n, 1), sublane))
    cands, rt, seen = [], top, set()
    while rt >= sublane:
        if rt not in seen:
            cands.append(rt)
            seen.add(rt)
        if rt == sublane:
            break
        rt = max(sublane, _round_up(rt // 2, sublane))
    return cands


def _hidden_tile_candidates(hidden):
    """Divisors of hidden, multiples of 256 first (MXU-friendly), then 128."""
    cap = min(hidden, 2048)
    start256 = (cap // 256) * 256
    start128 = (cap // 128) * 128
    m256 = [d for d in range(start256, 255, -256) if hidden % d == 0]
    m128 = [d for d in range(start128, 127, -128)
            if hidden % d == 0 and d % 256 != 0]
    return m256 + m128


def _choose_tiles(n, c_in, hidden, c_out_pad, x_dtype, w_dtype,
                  budget, row_target, sublane):
    xb = jnp.dtype(x_dtype).itemsize
    wb = jnp.dtype(w_dtype).itemsize
    rows = _row_candidates(n, sublane, row_target)

    def fits(rt, ht):
        return _vmem_need(rt, ht, c_in, c_out_pad, xb, wb) <= budget

    # Phase 1: keep the full weights VMEM-resident (fetched exactly once).
    rt_floor = min(256, rows[0])
    for rt in rows:
        if rt < rt_floor:
            break
        if fits(rt, hidden):
            return rt, hidden
    # Phase 2: stream the hidden dim; maximize the row tile first since it
    # amortizes the per-row-tile weight re-fetch.
    h_cands = _hidden_tile_candidates(hidden)
    for rt in rows:
        for ht in h_cands:
            if fits(rt, ht):
                return rt, ht
    # Phase 3: last resort — smallest row tile, full hidden.
    return rows[-1], hidden


def mlp_pallas(x, w1, b1, w2, b2, *, row_tile=None, hidden_tile=None,
               approx_gelu=False):
    """x: (..., C_in); w1: (C_in, H); b1: (H,); w2: (H, C_out); b2: (C_out,)."""
    orig_shape = x.shape
    c_in = orig_shape[-1]
    hidden = w1.shape[1]
    c_out = w2.shape[1]

    x2 = x.reshape(-1, c_in)
    n = x2.shape[0]

    # ---- lane-dense output: pad C_out to a multiple of 128 -----------------
    c_out_pad = max(_round_up(c_out, 128), 128)
    if c_out_pad != c_out:
        w2 = jnp.pad(w2, ((0, 0), (0, c_out_pad - c_out)))
        b2 = jnp.pad(b2, (0, c_out_pad - c_out))

    sublane = 16 if x.dtype == jnp.bfloat16 else 8
    budget, row_target, two_tc, phys = _tpu_budget()

    auto_rt, auto_ht = _choose_tiles(n, c_in, hidden, c_out_pad,
                                     x2.dtype, w1.dtype,
                                     budget, row_target, sublane)
    rt = auto_rt if row_tile is None else row_tile
    ht = auto_ht if hidden_tile is None else hidden_tile

    rt = min(_round_up(rt, sublane), _round_up(n, sublane))
    if hidden % ht != 0 or (ht != hidden and ht % 128 != 0):
        ht = hidden  # fall back to full hidden (always correct)

    # v7x megacore: ensure >= 2 row tiles so both TensorCores get work.
    if two_tc and _round_up(n, rt) // rt == 1 and rt >= 2 * sublane:
        rt = _round_up(rt // 2, sublane)

    n_pad = _round_up(n, rt)
    if n_pad != n:
        x2 = jnp.pad(x2, ((0, n_pad - n), (0, 0)))

    grid = (n_pad // rt, hidden // ht)

    need = _vmem_need(rt, ht, c_in, c_out_pad,
                      jnp.dtype(x2.dtype).itemsize,
                      jnp.dtype(w1.dtype).itemsize)
    vmem_limit = int(min(max(need * 3 // 2, 32 * 1024 * 1024),
                         phys - 8 * 1024 * 1024))

    b1_2 = b1.reshape(1, hidden)
    b2_2 = b2.reshape(1, c_out_pad)

    out = pl.pallas_call(
        partial(_mlp_kernel, approx_gelu=approx_gelu),
        out_shape=jax.ShapeDtypeStruct((n_pad, c_out_pad), x.dtype),
        grid_spec=pltpu.PrefetchScalarGridSpec(
            num_scalar_prefetch=0,
            grid=grid,
            in_specs=[
                pl.BlockSpec((rt, c_in), lambda i, j: (i, 0)),
                pl.BlockSpec((c_in, ht), lambda i, j: (0, j)),
                pl.BlockSpec((1, ht), lambda i, j: (0, j)),
                pl.BlockSpec((ht, c_out_pad), lambda i, j: (j, 0)),
                pl.BlockSpec((1, c_out_pad), lambda i, j: (0, 0)),
            ],
            out_specs=pl.BlockSpec((rt, c_out_pad), lambda i, j: (i, 0)),
            scratch_shapes=[pltpu.VMEM((rt, c_out_pad), jnp.float32)],
        ),
        compiler_params=pltpu.CompilerParams(
            dimension_semantics=("parallel", "arbitrary"),
            vmem_limit_bytes=vmem_limit,
        ),
    )(x2, w1, b1_2, w2, b2_2)

    out = out[:n, :c_out]
    return out.reshape(*orig_shape[:-1], c_out)


def init_mlp_params(key, in_features, hidden_features, out_features,
                    dtype=jnp.float32):
    """Deterministic init mimicking nn.Linear's kaiming-uniform + uniform bias."""
    k1, k2, k3, k4 = jax.random.split(key, 4)
    bound1 = 1.0 / math.sqrt(in_features)
    bound2 = 1.0 / math.sqrt(hidden_features)
    # stored already transposed as (in, out) so the kernel does x @ W
    w1 = jax.random.uniform(k1, (in_features, hidden_features), dtype,
                            minval=-bound1, maxval=bound1)
    b1 = jax.random.uniform(k2, (hidden_features,), dtype,
                            minval=-bound1, maxval=bound1)
    w2 = jax.random.uniform(k3, (hidden_features, out_features), dtype,
                            minval=-bound2, maxval=bound2)
    b2 = jax.random.uniform(k4, (out_features,), dtype,
                            minval=-bound2, maxval=bound2)
    return w1, b1, w2, b2


if __name__ == "__main__":
    key = jax.random.PRNGKey(0)
    kx, kp = jax.random.split(key)

    # Small shapes consistent with the module's token-MLP usage:
    # batch=2, seq=8, in_features=16, hidden=32, out=16.
    B, N, C_IN, HIDDEN, C_OUT = 2, 8, 16, 32, 16
    x = jax.random.normal(kx, (B, N, C_IN), dtype=jnp.float32)
    w1, b1, w2, b2 = init_mlp_params(kp, C_IN, HIDDEN, C_OUT)

    out = mlp_pallas(x, w1, b1, w2, b2)
    out = jax.block_until_ready(out)

    # reference check (plain JAX, erf GELU like torch.nn.GELU default)
    ref_h = jax.nn.gelu(x @ w1 + b1, approximate=False)
    ref = ref_h @ w2 + b2
    assert out.shape == (B, N, C_OUT)
    assert jnp.allclose(out, ref, atol=1e-5, rtol=1e-5)

    # TODO(synk): dropout with p > 0 (training mode) is not implemented; the
    # module's default p=0.0 makes it the identity.
    print("KERNEL_OK")
</pallas_src>

<mosaic_0001>
module attributes {stable_mosaic.version = 11 : i64} {
  func.func @_mlp_kernel(%arg0: i32, %arg1: i32, %arg2: memref<16x16xf32, #tpu.memory_space<vmem>>, %arg3: memref<16x32xf32, #tpu.memory_space<vmem>>, %arg4: memref<1x32xf32, #tpu.memory_space<vmem>>, %arg5: memref<32x128xf32, #tpu.memory_space<vmem>>, %arg6: memref<1x128xf32, #tpu.memory_space<vmem>>, %arg7: memref<16x128xf32, #tpu.memory_space<vmem>>, %arg8: memref<16x128xf32, #tpu.memory_space<vmem>>) attributes {dimension_semantics = [#tpu.dimension_semantics<parallel>, #tpu.dimension_semantics<arbitrary>], iteration_bounds = array<i64: 1, 1>, scalar_prefetch = 0 : i64, scratch_operands = 1 : i64, tpu.core_type = #tpu.core_type<tc>, window_params = [{transform_indices = @transform_0, window_bounds = array<i64: 16, 16>}, {transform_indices = @transform_1, window_bounds = array<i64: 16, 32>}, {transform_indices = @transform_2, window_bounds = array<i64: 1, 32>}, {transform_indices = @transform_3, window_bounds = array<i64: 32, 128>}, {pipeline_mode = #tpu.pipeline_mode<synchronous>, transform_indices = @transform_4, window_bounds = array<i64: 1, 128>}, {transform_indices = @transform_5, window_bounds = array<i64: 16, 128>}]} {
    %c0_i32 = arith.constant 0 : i32
    %0 = arith.cmpi eq, %arg1, %c0_i32 : i32
    %1 = arith.extui %0 : i1 to i32
    %c0_i32_0 = arith.constant 0 : i32
    %2 = arith.cmpi ne, %1, %c0_i32_0 : i32
    scf.if %2 {
      %c0_18 = arith.constant 0 : index
      %c0_19 = arith.constant 0 : index
      %25 = vector.load %arg6[%c0_18, %c0_19] : memref<1x128xf32, #tpu.memory_space<vmem>>, vector<1x128xf32>
      %26 = vector.shape_cast %25 : vector<1x128xf32> to vector<1x128xf32>
      %27 = vector.broadcast %26 : vector<1x128xf32> to vector<16x128xf32>
      %c0_20 = arith.constant 0 : index
      %c0_21 = arith.constant 0 : index
      %28 = vector.load %arg8[%c0_20, %c0_21] : memref<16x128xf32, #tpu.memory_space<vmem>>, vector<16x128xf32>
      tpu.vector_store %arg8[%c0_20, %c0_21], %27 {strides = array<i32>} : memref<16x128xf32, #tpu.memory_space<vmem>>, vector<16x128xf32>,
    } else {
    }
    %c0 = arith.constant 0 : index
    %c0_1 = arith.constant 0 : index
    %3 = vector.load %arg2[%c0, %c0_1] : memref<16x16xf32, #tpu.memory_space<vmem>>, vector<16x16xf32>
    %c0_2 = arith.constant 0 : index
    %c0_3 = arith.constant 0 : index
    %4 = vector.load %arg3[%c0_2, %c0_3] : memref<16x32xf32, #tpu.memory_space<vmem>>, vector<16x32xf32>
    %cst = arith.constant dense<0.000000e+00> : vector<16x32xf32>
    %5 = tpu.matmul %3, %4, %cst {dimension_numbers = #tpu.dot_dimension_numbers<[1], [0], [0], [1], [0, 0, 1, 1], [], []>} : vector<16x16xf32>, vector<16x32xf32>, vector<16x32xf32> -> vector<16x32xf32>
    %c0_4 = arith.constant 0 : index
    %c0_5 = arith.constant 0 : index
    %6 = vector.load %arg4[%c0_4, %c0_5] : memref<1x32xf32, #tpu.memory_space<vmem>>, vector<1x32xf32>
    %7 = vector.broadcast %6 : vector<1x32xf32> to vector<16x32xf32>
    %8 = arith.addf %5, %7 : vector<16x32xf32>
    %cst_6 = arith.constant 5.000000e-01 : f32
    %9 = vector.broadcast %cst_6 : f32 to vector<16x32xf32>
    %10 = arith.mulf %9, %8 : vector<16x32xf32>
    %cst_7 = arith.constant 0.707106769 : f32
    %11 = vector.broadcast %cst_7 : f32 to vector<16x32xf32>
    %12 = arith.mulf %8, %11 : vector<16x32xf32>
    %13 = math.erf %12 : vector<16x32xf32>
    %cst_8 = arith.constant 1.000000e+00 : f32
    %14 = vector.broadcast %cst_8 : f32 to vector<16x32xf32>
    %15 = arith.addf %14, %13 : vector<16x32xf32>
    %16 = arith.mulf %10, %15 : vector<16x32xf32>
    %c0_9 = arith.constant 0 : index
    %c0_10 = arith.constant 0 : index
    %17 = vector.load %arg8[%c0_9, %c0_10] : memref<16x128xf32, #tpu.memory_space<vmem>>, vector<16x128xf32>
    %c0_11 = arith.constant 0 : index
    %c0_12 = arith.constant 0 : index
    %18 = vector.load %arg5[%c0_11, %c0_12] : memref<32x128xf32, #tpu.memory_space<vmem>>, vector<32x128xf32>
    %cst_13 = arith.constant dense<0.000000e+00> : vector<16x128xf32>
    %19 = tpu.matmul %16, %18, %cst_13 {dimension_numbers = #tpu.dot_dimension_numbers<[1], [0], [0], [1], [0, 0, 1, 1], [], []>} : vector<16x32xf32>, vector<32x128xf32>, vector<16x128xf32> -> vector<16x128xf32>
    %20 = arith.addf %17, %19 : vector<16x128xf32>
    %c0_14 = arith.constant 0 : index
    %c0_15 = arith.constant 0 : index
    %21 = vector.load %arg8[%c0_14, %c0_15] : memref<16x128xf32, #tpu.memory_space<vmem>>, vector<16x128xf32>
    tpu.vector_store %arg8[%c0_14, %c0_15], %20 {strides = array<i32>} : memref<16x128xf32, #tpu.memory_space<vmem>>, vector<16x128xf32>,
    %c0_i32_16 = arith.constant 0 : i32
    %22 = arith.cmpi eq, %arg1, %c0_i32_16 : i32
    %23 = arith.extui %22 : i1 to i32
    %c0_i32_17 = arith.constant 0 : i32
    %24 = arith.cmpi ne, %23, %c0_i32_17 : i32
    scf.if %24 {
      %c0_18 = arith.constant 0 : index
      %c0_19 = arith.constant 0 : index
      %25 = vector.load %arg8[%c0_18, %c0_19] : memref<16x128xf32, #tpu.memory_space<vmem>>, vector<16x128xf32>
      %c0_20 = arith.constant 0 : index
      %c0_21 = arith.constant 0 : index
      %26 = vector.load %arg7[%c0_20, %c0_21] : memref<16x128xf32, #tpu.memory_space<vmem>>, vector<16x128xf32>
      tpu.vector_store %arg7[%c0_20, %c0_21], %25 {strides = array<i32>} : memref<16x128xf32, #tpu.memory_space<vmem>>, vector<16x128xf32>,
    } else {
    }
    return
  }
  func.func @transform_0(%arg0: i32, %arg1: i32) -> (i32, i32) {
    %c0_i32 = arith.constant 0 : i32
    %c0_i32_0 = arith.constant 0 : i32
    return %arg0, %c0_i32 : i32, i32
  }
  func.func @transform_1(%arg0: i32, %arg1: i32) -> (i32, i32) {
    %c0_i32 = arith.constant 0 : i32
    %c0_i32_0 = arith.constant 0 : i32
    return %c0_i32, %arg1 : i32, i32
  }
  func.func @transform_2(%arg0: i32, %arg1: i32) -> (i32, i32) {
    %c0_i32 = arith.constant 0 : i32
    %c0_i32_0 = arith.constant 0 : i32
    return %c0_i32, %arg1 : i32, i32
  }
  func.func @transform_3(%arg0: i32, %arg1: i32) -> (i32, i32) {
    %c0_i32 = arith.constant 0 : i32
    %c0_i32_0 = arith.constant 0 : i32
    return %arg1, %c0_i32 : i32, i32
  }
  func.func @transform_4(%arg0: i32, %arg1: i32) -> (i32, i32) {
    %c0_i32 = arith.constant 0 : i32
    %c0_i32_0 = arith.constant 0 : i32
    %c0_i32_1 = arith.constant 0 : i32
    return %c0_i32, %c0_i32_0 : i32, i32
  }
  func.func @transform_5(%arg0: i32, %arg1: i32) -> (i32, i32) {
    %c0_i32 = arith.constant 0 : i32
    %c0_i32_0 = arith.constant 0 : i32
    return %arg0, %c0_i32 : i32, i32
  }
}

</mosaic_0001>

<llo_original>
// kernel: tpu_custom_call.1
$region0: #{tpu_custom_call.1}
  #allocation0 [shape = 'u32[]', space=smem, size = 0x4, offset = 0x4, fixed_abs, tag = 'smem constant byte address 0x4 - core index']
  #allocation1 [shape = 'u32[72,128]{1,0:T(1,128)}', space=vmem, size = 0x9000, scoped, tag = 'internal scratch']
  #allocation2 [shape = 'f32[16,128]{1,0:T(8,128)}', space=vmem, size = 0x2000, scoped, tag = 'scratch operand']
  %s0 = inlined_call_operand.hbm [shape: f32[16,16], index: 0, kind: input, shape index: {}]
  %s1 = inlined_call_operand.hbm [shape: f32[16,32], index: 1, kind: input, shape index: {}]
  %s2 = inlined_call_operand.vmem [shape: f32[1,32], index: 2, kind: input, shape index: {}]
  %s3 = inlined_call_operand.hbm [shape: f32[32,128], index: 3, kind: input, shape index: {}]
  %s4 = inlined_call_operand.vmem [shape: f32[1,128], index: 4, kind: input, shape index: {}]
  %s5 = inlined_call_operand.hbm [shape: f32[16,128], index: 5, kind: output, shape index: {}]
  %s6 = sld [smem:[#allocation0]]
  $region50: #{tpu_custom_call.1} parent=0
    _
  %s8 = ssub.s32 1, %s6
  %s9 = scalar_select 0, %s8, %s6
  $region1: #{tpu_custom_call.1} parent=0
    #allocation3 [shape = 'u8[8192]{0}', space=vmem, size = 0x2000, scoped, tag = 'input window, operand 0, single buffered']
    #allocation4 [shape = 's32[1]{0}', space=sflag, size = 0x4, scoped, tag = 'scoped memory for tpu_custom_call.1']
    #allocation5 [shape = 's32[1]{0}', space=sflag, size = 0x4, scoped, tag = 'scoped memory for tpu_custom_call.1']
    #allocation6 [shape = 'u8[8192]{0}', space=vmem, size = 0x2000, scoped, tag = 'input window, operand 1, single buffered']
    #allocation7 [shape = 's32[1]{0}', space=sflag, size = 0x4, scoped, tag = 'scoped memory for tpu_custom_call.1']
    #allocation8 [shape = 'u8[16384]{0}', space=vmem, size = 0x4000, scoped, tag = 'input window, operand 3, single buffered']
    #allocation9 [shape = 'u8[8192]{0}', space=vmem, size = 0x2000, scoped, tag = 'output window, operand 0, single buffered']
    %10 = vsyncpa [#allocation4], 0
    %11 = vsyncpa [#allocation7], 0
    %12 = vsyncpa [#allocation5], 0
    // Predicated region
    $region2: #{tpu_custom_call.1} parent=1 // pred_check
      _
    $region3: #{tpu_custom_call.1} parent=1 // pred_check_branch
      %14 = sbr.rel (0) target = $region5
    $region4: #{tpu_custom_call.1} parent=1 // pred_region
      %16 = vsyncadd [#allocation4], 0
      %s17 = sshll.u32 %s0, 4
      %s18 = int_to_ptr.hbm [resolvable:$true] %s17
      %s19 = sshll.u32 [#allocation3], 4
      %s20 = int_to_ptr.vmem [resolvable:$true] %s19
      %25 = dma.hbm_to_vmem [thread:$0]  %s18, 256, %s20, [#allocation4], 128, 128, 8
    $region5: #{tpu_custom_call.1} parent=1 // pred_fallthru
      _
    // Predicated region
    $region6: #{tpu_custom_call.1} parent=1 // pred_check
      _
    $region7: #{tpu_custom_call.1} parent=1 // pred_check_branch
      %27 = sbr.rel (0) target = $region9
    $region8: #{tpu_custom_call.1} parent=1 // pred_region
      %29 = vsyncadd [#allocation7], 0
      %s30 = sshll.u32 %s1, 4
      %s31 = int_to_ptr.hbm [resolvable:$true] %s30
      %s32 = sshll.u32 [#allocation6], 4
      %s33 = int_to_ptr.vmem [resolvable:$true] %s32
      %38 = dma.hbm_to_vmem [thread:$0]  %s31, 256, %s33, [#allocation7], 128, 128, 8
    $region9: #{tpu_custom_call.1} parent=1 // pred_fallthru
      _
    // Predicated region
    $region10: #{tpu_custom_call.1} parent=1 // pred_check
      _
    $region11: #{tpu_custom_call.1} parent=1 // pred_check_branch
      %40 = sbr.rel (0) target = $region13
    $region12: #{tpu_custom_call.1} parent=1 // pred_region
      _
    $region13: #{tpu_custom_call.1} parent=1 // pred_fallthru
      _
    // Predicated region
    $region14: #{tpu_custom_call.1} parent=1 // pred_check
      _
    $region15: #{tpu_custom_call.1} parent=1 // pred_check_branch
      %42 = sbr.rel (0) target = $region17
    $region16: #{tpu_custom_call.1} parent=1 // pred_region
      %44 = vsyncadd [#allocation7], 0
      %s45 = sshll.u32 %s3, 4
      %s46 = int_to_ptr.hbm [resolvable:$true] %s45
      %s47 = sshll.u32 [#allocation8], 4
      %s48 = int_to_ptr.vmem [resolvable:$true] %s47
      %53 = dma.hbm_to_vmem [thread:$0]  %s46, 512, %s48, [#allocation7], 128, 128, 8
    $region17: #{tpu_custom_call.1} parent=1 // pred_fallthru
      _
    // Predicated region
    $region18: #{tpu_custom_call.1} parent=1 // pred_check
      _
    $region19: #{tpu_custom_call.1} parent=1 // pred_check_branch
      %55 = sbr.rel (0) target = $region21
    $region20: #{tpu_custom_call.1} parent=1 // pred_region
      _
    $region21: #{tpu_custom_call.1} parent=1 // pred_fallthru
      _
    // Predicated region
    $region22: #{tpu_custom_call.1} parent=1 // pred_check
      _
    $region23: #{tpu_custom_call.1} parent=1 // pred_check_branch
      %57 = sbr.rel (0) target = $region25
    $region24: #{tpu_custom_call.1} parent=1 // pred_region
      %59 = dma.done [#allocation4], 256
    $region25: #{tpu_custom_call.1} parent=1 // pred_fallthru
      _
    // Predicated region
    $region26: #{tpu_custom_call.1} parent=1 // pred_check
      _
    $region27: #{tpu_custom_call.1} parent=1 // pred_check_branch
      %61 = sbr.rel (0) target = $region29
    $region28: #{tpu_custom_call.1} parent=1 // pred_region
      %63 = dma.done [#allocation7], 256
    $region29: #{tpu_custom_call.1} parent=1 // pred_fallthru
      _
    // Predicated region
    $region30: #{tpu_custom_call.1} parent=1 // pred_check
      _
    $region31: #{tpu_custom_call.1} parent=1 // pred_check_branch
      %65 = sbr.rel (0) target = $region33
    $region32: #{tpu_custom_call.1} parent=1 // pred_region
      %67 = dma.done [#allocation7], 512
    $region33: #{tpu_custom_call.1} parent=1 // pred_fallthru
      _
    %p68 = scmp.eq.s32.totalorder 0, 0
    // Predicated region
    $region34: #{tpu_custom_call.1} parent=1 // pred_check
      %p69 = pneg %p68
    $region35: #{tpu_custom_call.1} parent=1 // pred_check_branch
      %71 = sbr.rel (%p69) target = $region37
    $region36: #{tpu_custom_call.1} parent=1 // pred_region
      %v72 = vld [vmem:[%s4] sm:$0x1]
      %v74 = vperm.slane %v72, 0
      %76 = vst [vmem:[#allocation2] sm:$0xff] %v74
      %77 = vst [vmem:[#allocation2 + $0x8] sm:$0xff] %v74
    $region37: #{tpu_custom_call.1} parent=1 // pred_fallthru
      _
    %v78 = vld [vmem:[#allocation3] sm:$0xff]
    %v79 = vld [vmem:[#allocation3 + $0x8] sm:$0xff]
    %v80 = vld [vmem:[#allocation6] sm:$0xff]
    %v81 = vld [vmem:[#allocation6 + $0x8] sm:$0xff]
    %v82 = vld [vmem:[%s2] sm:$0x1]
    %v84 = vperm.slane %v82, 0
    %vm86 = vcmask 130048
    %v88 = vsel %vm86, %v78, 0
    %v91 = vsel %vm86, %v79, 0
    %93 = vmatpush.msra.mxu0 0.0
    %94 = vmatpush.msra.mxu0 0.0
    %95 = vmatpush.msra.mxu0 0.0
    %96 = vmatpush.msra.mxu0 0.0
    %97 = vmatpush.msra.mxu0 0.0
    %98 = vmatpush.msra.mxu0 0.0
    %99 = vmatpush.msra.mxu0 0.0
    %100 = vmatpush.msra.mxu0 0.0
    %101 = vmatpush.msra.mxu0 0.0
    %102 = vmatpush.msra.mxu0 0.0
    %103 = vmatpush.msra.mxu0 0.0
    %104 = vmatpush.msra.mxu0 0.0
    %105 = vmatpush.msra.mxu0 0.0
    %106 = vmatpush.msra.mxu0 0.0
    %107 = vmatpush.msra.mxu0 %v81
    %108 = vmatpush.msra.mxu0 %v80
    %109 = vmatmul.f32.gmra.mxu0 %v88
    %v110 = vpop.f32.mrf.mxu0
    %v111 = vadd.f32 %v84, %v110
    %112 = vmatmul.f32.gmra.mxu0 %v91
    %v113 = vpop.f32.mrf.mxu0
    %v114 = vadd.f32 %v84, %v113
    %115 = vdwg.mxu0
    %v116 = vmul.f32 %v111, 0.5
    %v117 = vmul.f32 %v114, 0.5
    %v118 = vmul.f32 %v111, 0.70710677
    %v119 = vmul.f32 %v114, 0.70710677
    %v120 = vmul.f32 %v118, %v118
    %v121 = vmin.f32 16.0, %v120
    %v122 = vmul.f32 %v121, 2.1237322e-06
    %v123 = vadd.f32 %v122, 0.00028619796
    %v124 = vmul.f32 %v121, %v123
    %v125 = vadd.f32 %v124, 0.0036580483
    %v126 = vmul.f32 %v121, %v125
    %v127 = vadd.f32 %v126, 0.05243302
    %v128 = vmul.f32 %v121, %v127
    %v129 = vadd.f32 %v128, 0.18741608
    %v130 = vmul.f32 %v121, %v129
    %v131 = vadd.f32 %v130, 1.1283791
    %v132 = vmul.f32 %v118, %v131
    %v133 = vmul.f32 %v121, 3.8918573e-05
    %v134 = vadd.f32 %v133, 0.001143296
    %v135 = vmul.f32 %v121, %v134
    %v136 = vadd.f32 %v135, 0.014752088
    %v137 = vmul.f32 %v121, %v136
    %v138 = vadd.f32 %v137, 0.112945676
    %v139 = vmul.f32 %v121, %v138
    %v140 = vadd.f32 %v139, 0.4994258
    %v141 = vmul.f32 %v121, %v140
    %v142 = vadd.f32 %v141, 1.0
    %v143 = vrcp.pop %v142
    %v144 = vmul.f32 %v142, %v143
    %v145 = vsub.f32 1.0, %v144
    %v146 = vmul.f32 %v143, %v145
    %v147 = vadd.f32 %v143, %v146
    %vm148 = vweird.f32 %v142
    %vm149 = vweird.f32 %v143
    %vm150 = vmor %vm148, %vm149
    %v151 = vsel %vm150, %v143, %v147
    %v152 = vand.u32 2147483647, %v142
    %vm153 = vcmp.eq.f32.partialorder %v152, 8.507059e+37
    %v154 = vand.u32 %v142, 2147483648
    %v155 = vor.u32 1.1754944e-38, %v154
    %v156 = vsel %vm153, %v155, %v151
    %v157 = vmul.f32 %v132, %v156
    %v158 = vmin.f32 %v157, 1.0
    %v159 = vmax.f32 %v158, -1.0
    %v160 = vmul.f32 %v119, %v119
    %v161 = vmin.f32 16.0, %v160
    %v162 = vmul.f32 %v161, 2.1237322e-06
    %v163 = vadd.f32 %v162, 0.00028619796
    %v164 = vmul.f32 %v161, %v163
    %v165 = vadd.f32 %v164, 0.0036580483
    %v166 = vmul.f32 %v161, %v165
    %v167 = vadd.f32 %v166, 0.05243302
    %v168 = vmul.f32 %v161, %v167
    %v169 = vadd.f32 %v168, 0.18741608
    %v170 = vmul.f32 %v161, %v169
    %v171 = vadd.f32 %v170, 1.1283791
    %v172 = vmul.f32 %v119, %v171
    %v173 = vmul.f32 %v161, 3.8918573e-05
    %v174 = vadd.f32 %v173, 0.001143296
    %v175 = vmul.f32 %v161, %v174
    %v176 = vadd.f32 %v175, 0.014752088
    %v177 = vmul.f32 %v161, %v176
    %v178 = vadd.f32 %v177, 0.112945676
    %v179 = vmul.f32 %v161, %v178
    %v180 = vadd.f32 %v179, 0.4994258
    %v181 = vmul.f32 %v161, %v180
    %v182 = vadd.f32 %v181, 1.0
    %v183 = vrcp.pop %v182
    %v184 = vmul.f32 %v182, %v183
    %v185 = vsub.f32 1.0, %v184
    %v186 = vmul.f32 %v183, %v185
    %v187 = vadd.f32 %v183, %v186
    %vm188 = vweird.f32 %v182
    %vm189 = vweird.f32 %v183
    %vm190 = vmor %vm188, %vm189
    %v191 = vsel %vm190, %v183, %v187
    %v192 = vand.u32 2147483647, %v182
    %vm193 = vcmp.eq.f32.partialorder %v192, 8.507059e+37
    %v194 = vand.u32 %v182, 2147483648
    %v195 = vor.u32 1.1754944e-38, %v194
    %v196 = vsel %vm193, %v195, %v191
    %v197 = vmul.f32 %v172, %v196
    %v198 = vmin.f32 %v197, 1.0
    %v199 = vmax.f32 %v198, -1.0
    %v200 = vadd.f32 %v159, 1.0
    %v201 = vadd.f32 %v199, 1.0
    %v202 = vmul.f32 %v116, %v200
    %v203 = vmul.f32 %v117, %v201
    %v204 = vld [vmem:[#allocation2] sm:$0xff]
    %v205 = vld [vmem:[#allocation2 + $0x8] sm:$0xff]
    %v206 = vld [vmem:[#allocation8] sm:$0xff]
    %v207 = vld [vmem:[#allocation8 + $0x8] sm:$0xff]
    %v208 = vld [vmem:[#allocation8 + $0x10] sm:$0xff]
    %v209 = vld [vmem:[#allocation8 + $0x18] sm:$0xff]
    %vm210 = vcmask 261120
    %v212 = vsel %vm210, %v202, 0
    %v215 = vsel %vm210, %v203, 0
    %217 = vmatpush.msra.mxu0 0.0
    %218 = vmatpush.msra.mxu0 0.0
    %219 = vmatpush.msra.mxu0 0.0
    %220 = vmatpush.msra.mxu0 0.0
    %221 = vmatpush.msra.mxu0 0.0
    %222 = vmatpush.msra.mxu0 0.0
    %223 = vmatpush.msra.mxu0 0.0
    %224 = vmatpush.msra.mxu0 0.0
    %225 = vmatpush.msra.mxu0 0.0
    %226 = vmatpush.msra.mxu0 0.0
    %227 = vmatpush.msra.mxu0 0.0
    %228 = vmatpush.msra.mxu0 0.0
    %229 = vmatpush.msra.mxu0 %v209
    %230 = vmatpush.msra.mxu0 %v208
    %231 = vmatpush.msra.mxu0 %v207
    %232 = vmatpush.msra.mxu0 %v206
    %233 = vmatmul.f32.gmra.mxu0 %v212
    %v234 = vpop.f32.mrf.mxu0
    %v235 = vadd.f32 0.0, %v234
    %236 = vmatmul.f32.gmra.mxu0 %v215
    %v237 = vpop.f32.mrf.mxu0
    %v238 = vadd.f32 0.0, %v237
    %239 = vdwg.mxu0
    %v240 = vadd.f32 %v204, %v235
    %v241 = vadd.f32 %v205, %v238
    %242 = vst [vmem:[#allocation2] sm:$0xff] %v240
    %243 = vst [vmem:[#allocation2 + $0x8] sm:$0xff] %v241
    // Predicated region
    $region38: #{tpu_custom_call.1} parent=1 // pred_check
      %p244 = pneg %p68
    $region39: #{tpu_custom_call.1} parent=1 // pred_check_branch
      %246 = sbr.rel (%p244) target = $region41
    $region40: #{tpu_custom_call.1} parent=1 // pred_region
      %v247 = vld [vmem:[#allocation2] sm:$0xff]
      %v248 = vld [vmem:[#allocation2 + $0x8] sm:$0xff]
      %249 = vst [vmem:[#allocation9] sm:$0xff] %v247
      %250 = vst [vmem:[#allocation9 + $0x8] sm:$0xff] %v248
    $region41: #{tpu_custom_call.1} parent=1 // pred_fallthru
      _
    // Predicated region
    $region42: #{tpu_custom_call.1} parent=1 // pred_check
      _
    $region43: #{tpu_custom_call.1} parent=1 // pred_check_branch
      %252 = sbr.rel (0) target = $region45
    $region44: #{tpu_custom_call.1} parent=1 // pred_region
      %254 = vsyncadd [#allocation5], 0
      %s255 = sshll.u32 [#allocation9], 4
      %s256 = int_to_ptr.vmem [resolvable:$true] %s255
      %s257 = sshll.u32 %s5, 4
      %s258 = int_to_ptr.hbm [resolvable:$true] %s257
      %263 = dma.vmem_to_hbm [thread:$0]  %s256, 256, %s258, [#allocation5], 128, 128, 8
    $region45: #{tpu_custom_call.1} parent=1 // pred_fallthru
      _
    // Predicated region
    $region46: #{tpu_custom_call.1} parent=1 // pred_check
      _
    $region47: #{tpu_custom_call.1} parent=1 // pred_check_branch
      %265 = sbr.rel (0) target = $region49
    $region48: #{tpu_custom_call.1} parent=1 // pred_region
      %267 = dma.done [#allocation5], 256
    $region49: #{tpu_custom_call.1} parent=1 // pred_fallthru
      _
    %268 = vsyncpa [#allocation4], 1
    %269 = vsyncpa [#allocation7], 1
    %270 = vsyncpa [#allocation5], 1

</llo_original>
